<compile_context>
chip_gen: v5e
topology: v5e:2x2
jax: 0.10.0
libtpu: 0.0.40
codegen_flags: <defaults>
</compile_context>

<pallas_src>
import functools

import jax
import jax.numpy as jnp
import numpy as np
from jax.experimental import pallas as pl
from jax.experimental.pallas import tpu as pltpu


# ----------------------------- kernel ---------------------------------------


def _shortcut_conv3x3_kernel(xpad_ref, w_ref, b_ref, o_ref):
    """One (batch, width-tile, row-tile) grid step.

    xpad_ref: (1, 1, H+2, (TW+2)*C)  padded slab for this width tile
                                     (halo lanes come from neighbouring tiles)
    w_ref   : (3, (TW+2)*C, TW*C)    per-dy banded weights, residual identity
                                     folded into the centre tap
    b_ref   : (1, TW*C)              bias tiled along the width tile (f32)
    o_ref   : (1, TH, TW*C)          output row tile
    """
    th = o_ref.shape[1]
    nc = o_ref.shape[2]
    row0 = pl.multiple_of(pl.program_id(2) * th, th)

    # Accumulator initialised with the broadcast bias (no separate VPU pass).
    acc = jnp.broadcast_to(b_ref[...].astype(jnp.float32), (th, nc))

    # 3x3 conv (+ shortcut, folded into the centre tap) as 3 banded MXU matmuls.
    for dy in range(3):                                   # static, unrolled
        slab = xpad_ref[0, 0, pl.ds(row0 + dy, th), :]    # (TH, (TW+2)*C)
        acc = acc + jnp.dot(slab, w_ref[dy],
                            preferred_element_type=jnp.float32)

    o_ref[0] = acc.astype(o_ref.dtype)


# ------------------------ weight preparation --------------------------------


def _fold_and_band_weights(w_hwio, bias, C, TW, dtype):
    """Fold the residual identity into the centre tap and build the per-dy
    block-banded ((TW+2)*C, TW*C) matrices so conv3x3 + shortcut becomes three
    matmuls over merged (width_tile*channel) lanes.
      T[dy, (w+dx)*C + ci, w*C + co] = w_fold[dy, dx, ci, co]
    """
    w_fold = w_hwio.astype(jnp.float32)
    w_fold = w_fold.at[1, 1].add(jnp.eye(C, dtype=jnp.float32))   # shortcut

    eye_w = jnp.eye(TW, dtype=jnp.float32)
    t_dy = []
    for dy in range(3):
        t = jnp.zeros(((TW + 2) * C, TW * C), jnp.float32)
        for dx in range(3):
            shift = jnp.pad(eye_w, ((dx, 2 - dx), (0, 0)))        # (TW+2, TW)
            t = t + jnp.kron(shift, w_fold[dy, dx])
        t_dy.append(t)
    w_band = jnp.stack(t_dy).astype(dtype)                         # (3,(TW+2)C,TWC)

    b_row = jnp.tile(bias.astype(jnp.float32), TW).reshape(1, TW * C)
    return w_band, b_row


# --------------------------- tile selection ----------------------------------


def _pick_tile_w(W, C):
    """Width tile.  TW < W only when TW*C is a multiple of 128 (legal, lane-dense
    unmasked output block); prefer TW*C in [128, 512]."""
    if W * C <= 512:
        return W
    cands = [tw for tw in range(1, W) if W % tw == 0 and (tw * C) % 128 == 0]
    if not cands:
        return W                       # no legal lane-dense tile: full-width band
    small = [tw for tw in cands if tw * C <= 512]
    return max(small) if small else min(cands)


def _pick_tile_h(H, outer_steps, out_row_bytes, fixed_bytes,
                 budget_bytes=40 << 20):
    """Largest multiple-of-8 row tile dividing H that fits the VMEM budget and
    keeps >= 2 total grid steps (pipelining / v7x megacore)."""
    cands = [d for d in range(8, H + 1, 8) if H % d == 0]
    if not cands:
        return H                       # odd H: single full-height tile
    best = cands[0]
    for d in cands:
        if (outer_steps * (H // d) >= 2
                and fixed_bytes + 2 * d * out_row_bytes <= budget_bytes):
            best = d
    return best


# ------------------------------ forward --------------------------------------


def _forward(x_nchw, w_band, b_row, *, th, tw):
    N, C, H, W = x_nchw.shape
    dtype = x_nchw.dtype
    n_wt = W // tw
    kin = (tw + 2) * C
    kout = tw * C
    ht = H // th

    # --- layout prep (fused under jit) ---
    # TODO(synk): if the surrounding network keeps activations in NHWC, accept /
    # return NHWC directly and drop these transposes (two full-image HBM passes).
    x = jnp.transpose(x_nchw, (0, 2, 3, 1))                      # NHWC
    xpad = jnp.pad(x, ((0, 0), (1, 1), (1, 1), (0, 0)))          # SAME padding
    if n_wt == 1:
        xt = xpad.reshape(N, 1, H + 2, kin)
    else:
        # per-width-tile slabs including the 1-pixel halo on each side
        slabs = [xpad[:, :, j * tw: j * tw + tw + 2, :] for j in range(n_wt)]
        xt = jnp.stack(slabs, axis=1).reshape(N, n_wt, H + 2, kin)

    # Explicit scoped-VMEM limit derived from the actual block footprint.
    blk_bytes = (2 * (H + 2) * kin * dtype.itemsize       # xpad slab (dbl-buffered)
                 + 2 * 3 * kin * kout * dtype.itemsize    # banded weights
                 + 2 * kout * 4                           # bias
                 + 2 * th * kout * dtype.itemsize         # output tile
                 + th * kout * 4)                         # f32 accumulator
    vmem_limit = int(min(max(blk_bytes + (8 << 20), 32 << 20), 100 << 20))

    # TODO(synk): for very large H*W*C (v7x 64 MiB VMEM) switch the xpad input to
    # memory_space=pl.ANY with a manual double-buffered (TH+2, kin) halo DMA, and
    # single-buffer the grid-invariant weight/bias (pipeline_mode=pl.Buffered(1)).
    out = pl.pallas_call(
        _shortcut_conv3x3_kernel,
        out_shape=jax.ShapeDtypeStruct((N, H, W * C), dtype),
        grid_spec=pltpu.PrefetchScalarGridSpec(
            num_scalar_prefetch=0,
            grid=(N, n_wt, ht),
            in_specs=[
                # width-tile slab: resident across the innermost row-tile axis
                pl.BlockSpec((1, 1, H + 2, kin), lambda n, j, h: (n, j, 0, 0)),
                pl.BlockSpec((3, kin, kout), lambda n, j, h: (0, 0, 0)),
                pl.BlockSpec((1, kout), lambda n, j, h: (0, 0)),
            ],
            out_specs=pl.BlockSpec((1, th, kout), lambda n, j, h: (n, h, j)),
        ),
        compiler_params=pltpu.CompilerParams(
            dimension_semantics=("parallel", "parallel", "parallel"),
            vmem_limit_bytes=vmem_limit),
    )(xt, w_band, b_row)

    out = out.reshape(N, H, W, C)
    return jnp.transpose(out, (0, 3, 1, 2))                      # back to NCHW


_forward_jit = jax.jit(_forward, static_argnames=("th", "tw"))


class ShortcutBlock:
    """y = x + Conv2d(C, C, 3, padding=1)(x)  (NCHW in / NCHW out).

    Banded weights are prepared once per (C, TW, dtype) and cached, so the
    O(TW^2*C^2) weight construction is not re-done (and re-written to HBM)
    on every forward call.
    """

    def __init__(self, w_hwio, b):
        self.w_hwio = jnp.asarray(w_hwio)      # (3, 3, C, C)   HWIO
        self.b = jnp.asarray(b)                # (C,)
        self._band_cache = {}

    def _banded(self, C, tw, dtype):
        key = (C, tw, jnp.dtype(dtype).name)
        if key not in self._band_cache:
            self._band_cache[key] = _fold_and_band_weights(
                self.w_hwio, self.b, C, tw, dtype)
        return self._band_cache[key]

    def __call__(self, x_nchw, *, tile_h=None, tile_w=None, compute_dtype=None):
        N, C, H, W = x_nchw.shape
        dtype = jnp.dtype(compute_dtype) if compute_dtype is not None \
            else jnp.dtype(x_nchw.dtype)

        tw = tile_w or _pick_tile_w(W, C)
        if W % tw:
            raise ValueError(f"tile_w={tw} must divide W={W}")
        n_wt = W // tw

        w_band, b_row = self._banded(C, tw, dtype)

        out_row_bytes = tw * C * (dtype.itemsize + 4)          # out tile + f32 acc
        fixed_bytes = (2 * (H + 2) * (tw + 2) * C * dtype.itemsize
                       + 2 * int(w_band.size) * dtype.itemsize)
        th = tile_h or _pick_tile_h(H, N * n_wt, out_row_bytes, fixed_bytes)
        if H % th:
            raise ValueError(f"tile_h={th} must divide H={H}")

        y = _forward_jit(x_nchw.astype(dtype), w_band, b_row, th=th, tw=tw)
        return y.astype(x_nchw.dtype)


# ----------------------------- reference -------------------------------------


def _reference(x_nchw, w_hwio, b):
    """Pure-JAX reference: x + conv3x3(x) + bias, NCHW in / NCHW out."""
    x = jnp.transpose(x_nchw, (0, 2, 3, 1))
    y = jax.lax.conv_general_dilated(
        x, w_hwio, window_strides=(1, 1), padding="SAME",
        dimension_numbers=("NHWC", "HWIO", "NHWC"))
    y = y + b.reshape(1, 1, 1, -1)
    return x_nchw + jnp.transpose(y, (0, 3, 1, 2))


if __name__ == "__main__":
    N, C, H, W = 2, 4, 16, 16

    key = jax.random.PRNGKey(0)
    kx, kw, kb = jax.random.split(key, 3)

    x = jax.random.normal(kx, (N, C, H, W), dtype=jnp.float32)
    # deterministic synthetic conv params (Conv2d(C, C, kernel_size=3, padding=1))
    w = jax.random.normal(kw, (3, 3, C, C), dtype=jnp.float32) * 0.1
    b = jax.random.normal(kb, (C,), dtype=jnp.float32) * 0.1

    block = ShortcutBlock(w, b)

    out = jax.block_until_ready(block(x))
    ref = jax.block_until_ready(_reference(x, w, b))
    np.testing.assert_allclose(np.asarray(out), np.asarray(ref),
                               rtol=1e-4, atol=1e-4)

    print("KERNEL_OK")
</pallas_src>

<mosaic_0001>
module attributes {stable_mosaic.version = 11 : i64} {
  func.func @_shortcut_conv3x3_kernel(%arg0: i32, %arg1: i32, %arg2: i32, %arg3: memref<1x1x18x72xf32, #tpu.memory_space<vmem>>, %arg4: memref<3x72x64xf32, #tpu.memory_space<vmem>>, %arg5: memref<1x64xf32, #tpu.memory_space<vmem>>, %arg6: memref<1x16x64xf32, #tpu.memory_space<vmem>>) attributes {dimension_semantics = [#tpu.dimension_semantics<parallel>, #tpu.dimension_semantics<parallel>, #tpu.dimension_semantics<parallel>], iteration_bounds = array<i64: 2, 1, 1>, scalar_prefetch = 0 : i64, scratch_operands = 0 : i64, tpu.core_type = #tpu.core_type<tc>, window_params = [{transform_indices = @transform_0, window_bounds = array<i64: 1, 1, 18, 72>}, {pipeline_mode = #tpu.pipeline_mode<synchronous>, transform_indices = @transform_1, window_bounds = array<i64: 3, 72, 64>}, {pipeline_mode = #tpu.pipeline_mode<synchronous>, transform_indices = @transform_2, window_bounds = array<i64: 1, 64>}, {transform_indices = @transform_3, window_bounds = array<i64: 1, 16, 64>}]} {
    %c16_i32 = arith.constant 16 : i32
    %0 = arith.muli %arg2, %c16_i32 : i32
    %1 = tpu.assume_multiple %0, 16 : i32
    %c0 = arith.constant 0 : index
    %c0_0 = arith.constant 0 : index
    %2 = vector.load %arg5[%c0, %c0_0] : memref<1x64xf32, #tpu.memory_space<vmem>>, vector<1x64xf32>
    %3 = vector.shape_cast %2 : vector<1x64xf32> to vector<1x64xf32>
    %4 = vector.broadcast %3 : vector<1x64xf32> to vector<16x64xf32>
    %c0_i32 = arith.constant 0 : i32
    %5 = arith.addi %1, %c0_i32 : i32
    %c0_1 = arith.constant 0 : index
    %c0_2 = arith.constant 0 : index
    %6 = arith.index_cast %5 : i32 to index
    %c0_3 = arith.constant 0 : index
    %7 = vector.load %arg3[%c0_1, %c0_2, %6, %c0_3] : memref<1x1x18x72xf32, #tpu.memory_space<vmem>>, vector<1x1x16x72xf32>
    %8 = vector.shape_cast %7 : vector<1x1x16x72xf32> to vector<16x72xf32>
    %c0_4 = arith.constant 0 : index
    %c0_5 = arith.constant 0 : index
    %c0_6 = arith.constant 0 : index
    %9 = vector.load %arg4[%c0_4, %c0_5, %c0_6] : memref<3x72x64xf32, #tpu.memory_space<vmem>>, vector<1x72x64xf32>
    %10 = vector.shape_cast %9 : vector<1x72x64xf32> to vector<72x64xf32>
    %cst = arith.constant dense<0.000000e+00> : vector<16x64xf32>
    %11 = tpu.matmul %8, %10, %cst {dimension_numbers = #tpu.dot_dimension_numbers<[1], [0], [0], [1], [0, 0, 1, 1], [], []>} : vector<16x72xf32>, vector<72x64xf32>, vector<16x64xf32> -> vector<16x64xf32>
    %12 = arith.addf %4, %11 : vector<16x64xf32>
    %c1_i32 = arith.constant 1 : i32
    %13 = arith.addi %1, %c1_i32 : i32
    %c0_7 = arith.constant 0 : index
    %c0_8 = arith.constant 0 : index
    %14 = arith.index_cast %13 : i32 to index
    %c0_9 = arith.constant 0 : index
    %15 = vector.load %arg3[%c0_7, %c0_8, %14, %c0_9] : memref<1x1x18x72xf32, #tpu.memory_space<vmem>>, vector<1x1x16x72xf32>
    %16 = vector.shape_cast %15 : vector<1x1x16x72xf32> to vector<16x72xf32>
    %c1 = arith.constant 1 : index
    %c0_10 = arith.constant 0 : index
    %c0_11 = arith.constant 0 : index
    %17 = vector.load %arg4[%c1, %c0_10, %c0_11] : memref<3x72x64xf32, #tpu.memory_space<vmem>>, vector<1x72x64xf32>
    %18 = vector.shape_cast %17 : vector<1x72x64xf32> to vector<72x64xf32>
    %cst_12 = arith.constant dense<0.000000e+00> : vector<16x64xf32>
    %19 = tpu.matmul %16, %18, %cst_12 {dimension_numbers = #tpu.dot_dimension_numbers<[1], [0], [0], [1], [0, 0, 1, 1], [], []>} : vector<16x72xf32>, vector<72x64xf32>, vector<16x64xf32> -> vector<16x64xf32>
    %20 = arith.addf %12, %19 : vector<16x64xf32>
    %c2_i32 = arith.constant 2 : i32
    %21 = arith.addi %1, %c2_i32 : i32
    %c0_13 = arith.constant 0 : index
    %c0_14 = arith.constant 0 : index
    %22 = arith.index_cast %21 : i32 to index
    %c0_15 = arith.constant 0 : index
    %23 = vector.load %arg3[%c0_13, %c0_14, %22, %c0_15] : memref<1x1x18x72xf32, #tpu.memory_space<vmem>>, vector<1x1x16x72xf32>
    %24 = vector.shape_cast %23 : vector<1x1x16x72xf32> to vector<16x72xf32>
    %c2 = arith.constant 2 : index
    %c0_16 = arith.constant 0 : index
    %c0_17 = arith.constant 0 : index
    %25 = vector.load %arg4[%c2, %c0_16, %c0_17] : memref<3x72x64xf32, #tpu.memory_space<vmem>>, vector<1x72x64xf32>
    %26 = vector.shape_cast %25 : vector<1x72x64xf32> to vector<72x64xf32>
    %cst_18 = arith.constant dense<0.000000e+00> : vector<16x64xf32>
    %27 = tpu.matmul %24, %26, %cst_18 {dimension_numbers = #tpu.dot_dimension_numbers<[1], [0], [0], [1], [0, 0, 1, 1], [], []>} : vector<16x72xf32>, vector<72x64xf32>, vector<16x64xf32> -> vector<16x64xf32>
    %28 = arith.addf %20, %27 : vector<16x64xf32>
    %c0_19 = arith.constant 0 : index
    %c0_20 = arith.constant 0 : index
    %c0_21 = arith.constant 0 : index
    %29 = vector.load %arg6[%c0_19, %c0_20, %c0_21] : memref<1x16x64xf32, #tpu.memory_space<vmem>>, vector<1x16x64xf32>
    %30 = vector.shape_cast %29 : vector<1x16x64xf32> to vector<16x64xf32>
    %31 = vector.shape_cast %28 : vector<16x64xf32> to vector<1x16x64xf32>
    tpu.vector_store %arg6[%c0_19, %c0_20, %c0_21], %31 {strides = array<i32>} : memref<1x16x64xf32, #tpu.memory_space<vmem>>, vector<1x16x64xf32>,
    return
  }
  func.func @transform_0(%arg0: i32, %arg1: i32, %arg2: i32) -> (i32, i32, i32, i32) {
    %c0_i32 = arith.constant 0 : i32
    %c0_i32_0 = arith.constant 0 : i32
    %c0_i32_1 = arith.constant 0 : i32
    return %arg0, %arg1, %c0_i32, %c0_i32_0 : i32, i32, i32, i32
  }
  func.func @transform_1(%arg0: i32, %arg1: i32, %arg2: i32) -> (i32, i32, i32) {
    %c0_i32 = arith.constant 0 : i32
    %c0_i32_0 = arith.constant 0 : i32
    %c0_i32_1 = arith.constant 0 : i32
    %c0_i32_2 = arith.constant 0 : i32
    return %c0_i32, %c0_i32_0, %c0_i32_1 : i32, i32, i32
  }
  func.func @transform_2(%arg0: i32, %arg1: i32, %arg2: i32) -> (i32, i32) {
    %c0_i32 = arith.constant 0 : i32
    %c0_i32_0 = arith.constant 0 : i32
    %c0_i32_1 = arith.constant 0 : i32
    return %c0_i32, %c0_i32_0 : i32, i32
  }
  func.func @transform_3(%arg0: i32, %arg1: i32, %arg2: i32) -> (i32, i32, i32) {
    %c0_i32 = arith.constant 0 : i32
    return %arg0, %arg2, %arg1 : i32, i32, i32
  }
}

</mosaic_0001>

<llo_original>
// kernel: _forward.1
$region0: #{_forward.1}
  #allocation0 [shape = 'u32[]', space=smem, size = 0x4, offset = 0x4, fixed_abs, tag = 'smem constant byte address 0x4 - core index']
  #allocation1 [shape = 'u32[72,128]{1,0:T(1,128)}', space=vmem, size = 0x9000, scoped, tag = 'internal scratch']
  %s0 = inlined_call_operand.vmem [shape: f32[2,1,18,72], index: 0, kind: input, shape index: {}]
  %s1 = inlined_call_operand.vmem [shape: f32[3,72,64], index: 1, kind: input, shape index: {}]
  %s2 = inlined_call_operand.vmem [shape: f32[1,64], index: 2, kind: input, shape index: {}]
  %s3 = inlined_call_operand.vmem [shape: f32[2,16,64], index: 3, kind: output, shape index: {}]
  %s4 = sld [smem:[#allocation0]]
  $region45: #{_forward.1} parent=0
    _
  %s6 = ssub.s32 1, %s4
  %s7 = scalar_select 0, %s6, %s4
  loop: start=0, step=1, limit=4
  $region2: #{_forward.1} parent=0 // loop_pre_header
    _
  $region3: #{_forward.1} parent=0 // loop_header
    %s9 = sphi 0, %s13
    %p10 = scmp.ge.s32.totalorder %s9, 4
    %s16 = sphi 0, %s35
    %s17 = sphi 0, %s31
    %s18 = sphi 0, %s27
    %s19 = sphi 0, %s16
    %s20 = sphi 0, %s17
    %s21 = sphi 0, %s18
    %s22 = sphi 0, %s19
    %s23 = sphi 0, %s20
    %s24 = sphi 0, %s21
    %s40 = sphi 0, %s42
    %s43 = sphi 0, %s40
    %s44 = sphi 0, %s43
    %s60 = sphi 0, %s44
    %s64 = sphi 0, %s64
    %s66 = sphi 0, %s64
    %s67 = sphi 0, %s66
    %s81 = sphi 0, %s67
    %s85 = sphi 0, %s85
    %s87 = sphi 0, %s85
    %s88 = sphi 0, %s87
    %s102 = sphi 0, %s88
    %s112 = sphi 0, %s114
    %s115 = sphi 0, %s112
    %s116 = sphi 0, %s115
    %s132 = sphi 0, %s116
  $region4: #{_forward.1} parent=0 // loop_header_branch
    %12 = sbr.rel (%p10) target = $region8
  $region5: #{_forward.1} parent=0 // loop_body
    %s14 = ssub.s32 %s9, 1
    %s15 = ssub.s32 %s9, 2
    %s25 = sadd.s32 1, %s18
    %p26 = scmp.ge.s32.totalorder %s25, 1
    %s27 = scalar_select %p26, 0, %s25
    %s28 = sadd.s32 1, %s17
    %s29 = scalar_select %p26, %s28, %s17
    %p30 = scmp.ge.s32.totalorder %s29, 1
    %s31 = scalar_select %p30, 0, %s29
    %s32 = sadd.s32 1, %s16
    %s33 = scalar_select %p30, %s32, %s16
    %p34 = scmp.ge.s32.totalorder %s33, 2
    %s35 = scalar_select %p34, 0, %s33
    %s36 = ssub.s32 %s16, %s35
    %s37 = ssub.s32 %s17, %s31
    %s38 = sor.u32 %s36, %s37
    %p39 = scmp.eq.s32.totalorder %s38, 0
    %s41 = sadd.s32 %s40, 1
    %s42 = scalar_select %p39, %s40, %s41
    %p45 = pneg %p39
    %p46 = scmp.eq.s32.totalorder %s9, 1
    %p47 = por %p45, %p46
    %p48 = scmp.ne.s32.totalorder %s40, %s43
    %p49 = scmp.eq.s32.totalorder %s9, 0
    %p50 = por %p48, %p49
    %p51 = scmp.ne.s32.totalorder %s40, %s43
    %p52 = scmp.eq.s32.totalorder %s14, 1
    %p53 = por %p51, %p52
    %p54 = scmp.ne.s32.totalorder %s43, %s44
    %p55 = scmp.eq.s32.totalorder %s14, 0
    %p56 = por %p54, %p55
    %p57 = scmp.ne.s32.totalorder %s43, %s44
    %p58 = scmp.eq.s32.totalorder %s15, 1
    %p59 = por %p57, %p58
    %p61 = scmp.ne.s32.totalorder %s44, %s60
    %p62 = scmp.eq.s32.totalorder %s15, 0
    %p63 = por %p61, %p62
    %s65 = sadd.s32 %s64, 1
    %p68 = scmp.eq.s32.totalorder %s9, 1
    %p69 = scmp.ne.s32.totalorder %s64, %s66
    %p70 = scmp.eq.s32.totalorder %s9, 0
    %p71 = por %p69, %p70
    %p72 = scmp.ne.s32.totalorder %s64, %s66
    %p73 = scmp.eq.s32.totalorder %s14, 1
    %p74 = por %p72, %p73
    %p75 = scmp.ne.s32.totalorder %s66, %s67
    %p76 = scmp.eq.s32.totalorder %s14, 0
    %p77 = por %p75, %p76
    %p78 = scmp.ne.s32.totalorder %s66, %s67
    %p79 = scmp.eq.s32.totalorder %s15, 1
    %p80 = por %p78, %p79
    %p82 = scmp.ne.s32.totalorder %s67, %s81
    %p83 = scmp.eq.s32.totalorder %s15, 0
    %p84 = por %p82, %p83
    %s86 = sadd.s32 %s85, 1
    %p89 = scmp.eq.s32.totalorder %s9, 1
    %p90 = scmp.ne.s32.totalorder %s85, %s87
    %p91 = scmp.eq.s32.totalorder %s9, 0
    %p92 = por %p90, %p91
    %p93 = scmp.ne.s32.totalorder %s85, %s87
    %p94 = scmp.eq.s32.totalorder %s14, 1
    %p95 = por %p93, %p94
    %p96 = scmp.ne.s32.totalorder %s87, %s88
    %p97 = scmp.eq.s32.totalorder %s14, 0
    %p98 = por %p96, %p97
    %p99 = scmp.ne.s32.totalorder %s87, %s88
    %p100 = scmp.eq.s32.totalorder %s15, 1
    %p101 = por %p99, %p100
    %p103 = scmp.ne.s32.totalorder %s88, %s102
    %p104 = scmp.eq.s32.totalorder %s15, 0
    %p105 = por %p103, %p104
    %s106 = ssub.s32 %s16, %s35
    %s107 = ssub.s32 %s18, %s27
    %s108 = sor.u32 %s106, %s107
    %s109 = ssub.s32 %s17, %s31
    %s110 = sor.u32 %s108, %s109
    %p111 = scmp.eq.s32.totalorder %s110, 0
    %s113 = sadd.s32 %s112, 1
    %s114 = scalar_select %p111, %s112, %s113
    %p117 = pneg %p111
    %p118 = scmp.eq.s32.totalorder %s9, 1
    %p119 = por %p117, %p118
    %p120 = scmp.ne.s32.totalorder %s112, %s115
    %p121 = scmp.eq.s32.totalorder %s9, 0
    %p122 = por %p120, %p121
    %p123 = scmp.ne.s32.totalorder %s112, %s115
    %p124 = scmp.eq.s32.totalorder %s14, 1
    %p125 = por %p123, %p124
    %p126 = scmp.ne.s32.totalorder %s115, %s116
    %p127 = scmp.eq.s32.totalorder %s14, 0
    %p128 = por %p126, %p127
    %p129 = scmp.ne.s32.totalorder %s115, %s116
    %p130 = scmp.eq.s32.totalorder %s15, 1
    %p131 = por %p129, %p130
    %p133 = scmp.ne.s32.totalorder %s116, %s132
    %p134 = scmp.eq.s32.totalorder %s15, 0
    %p135 = por %p133, %p134
    %p136 = scmp.le.s32.totalorder 1, %s9
    %p137 = scmp.lt.s32.totalorder %s9, 3
    %p138 = pnand %p136, %p137
    %p139 = pneg %p138
    // Predicated region
    $region9: #{_forward.1} parent=5 // pred_check
      _
    $region10: #{_forward.1} parent=5 // pred_check_branch
      %141 = sbr.rel (%p138) target = $region12
    $region11: #{_forward.1} parent=5 // pred_region
      %s142 = ssub.s32 %s9, 1
      // Predicated region
      $region13: #{_forward.1} parent=11 // pred_check
        %p143 = pneg %p77
      $region14: #{_forward.1} parent=11 // pred_check_branch
        %145 = sbr.rel (%p143) target = $region16
      $region15: #{_forward.1} parent=11 // pred_region
        _
      $region16: #{_forward.1} parent=11 // pred_fallthru
        _
      // Predicated region
      $region17: #{_forward.1} parent=11 // pred_check
        %p146 = pneg %p98
      $region18: #{_forward.1} parent=11 // pred_check_branch
        %148 = sbr.rel (%p146) target = $region20
      $region19: #{_forward.1} parent=11 // pred_region
        _
      $region20: #{_forward.1} parent=11 // pred_fallthru
        _
    $region12: #{_forward.1} parent=5 // pred_fallthru
      _
    %p149 = scmp.lt.s32.totalorder %s9, 2
    // Predicated region
    $region21: #{_forward.1} parent=5 // pred_check
      %p150 = pneg %p149
    $region22: #{_forward.1} parent=5 // pred_check_branch
      %152 = sbr.rel (%p150) target = $region24
    $region23: #{_forward.1} parent=5 // pred_region
      // Predicated region
      $region25: #{_forward.1} parent=23 // pred_check
        %p153 = pneg %p50
      $region26: #{_forward.1} parent=23 // pred_check_branch
        %155 = sbr.rel (%p153) target = $region28
      $region27: #{_forward.1} parent=23 // pred_region
        %p156 = scmp.lt.s32.totalorder %s16, 1
        %s157 = scalar_select %p156, %s16, 1
        %p158 = scmp.lt.s32.totalorder %s17, 0
        %s159 = scalar_select %p158, %s17, 0
        %s160 = smul.addr %s159, 3
        %s161 = smul.addr %s157, 3
        %s162 = sadd.s32 %s160, %s161
        %s163 = smul.addr %s162, 8
        %s164 = scalar_lea.vmem %s0, %s163
      $region28: #{_forward.1} parent=23 // pred_fallthru
        _
    $region24: #{_forward.1} parent=5 // pred_fallthru
      _
    %p165 = scmp.le.s32.totalorder 1, %s9
    %p166 = scmp.lt.s32.totalorder %s9, 3
    %p167 = pnand %p165, %p166
    %p168 = pneg %p167
    // Predicated region
    $region29: #{_forward.1} parent=5 // pred_check
      _
    $region30: #{_forward.1} parent=5 // pred_check_branch
      %170 = sbr.rel (%p167) target = $region32
    $region31: #{_forward.1} parent=5 // pred_region
      %s171 = ssub.s32 %s9, 1
      %p172 = scmp.lt.s32.totalorder %s19, 1
      %s173 = scalar_select %p172, %s19, 1
      %p174 = scmp.lt.s32.totalorder %s20, 0
      %s175 = scalar_select %p174, %s20, 0
      %s176 = smul.addr %s175, 3
      %s177 = smul.addr %s173, 3
      %s178 = sadd.s32 %s176, %s177
      %s179 = smul.addr %s178, 8
      %s180 = scalar_lea.vmem %s0, %s179
      %p181 = pneg %p56
      %p182 = pneg %p53
      %p183 = pneg %p77
      %p184 = pneg %p74
      %p185 = pneg %p98
      %p186 = pneg %p95
      %p187 = pneg %p128
      %p188 = pneg %p125
      %s189 = smul.u32 2, %s21
      %p190 = scmp.lt.s32.totalorder %s19, 1
      %s191 = scalar_select %p190, %s19, 1
      %p192 = scmp.lt.s32.totalorder %s189, 1
      %s193 = scalar_select %p192, %s189, 1
      %p194 = scmp.lt.s32.totalorder %s20, 0
      %s195 = scalar_select %p194, %s20, 0
      %s196 = sadd.s32 %s195, %s193
      %s197 = smul.addr %s191, 2
      %s198 = sadd.s32 %s196, %s197
      %s199 = smul.addr %s198, 8
      %s200 = scalar_lea.vmem %s3, %s199
      %p201 = scmp.lt.s32.totalorder %s19, 1
      %s202 = scalar_select %p201, %s19, 1
      %p203 = scmp.lt.s32.totalorder %s20, 0
      %s204 = scalar_select %p203, %s20, 0
      %s205 = smul.addr %s204, 3
      %s206 = smul.addr %s202, 3
      %s207 = sadd.s32 %s205, %s206
      %s208 = smul.addr %s207, 8
      %s209 = scalar_lea.vmem %s0, %s208
      %s210 = smul.u32 2, %s21
      %p211 = scmp.lt.s32.totalorder %s19, 1
      %s212 = scalar_select %p211, %s19, 1
      %p213 = scmp.lt.s32.totalorder %s210, 1
      %s214 = scalar_select %p213, %s210, 1
      %p215 = scmp.lt.s32.totalorder %s20, 0
      %s216 = scalar_select %p215, %s20, 0
      %s217 = sadd.s32 %s216, %s214
      %s218 = smul.addr %s212, 2
      %s219 = sadd.s32 %s217, %s218
      %s220 = smul.addr %s219, 8
      %s221 = scalar_lea.vmem %s3, %s220
      %s222 = smul.u32 2, %s21
      %s223 = smul.u32 %s21, 16
      %v224 = vld [vmem:[%s2] sm:$0x1]
      %v226 = vperm.slane %v224, 0
      %s228 = scalar_lea.vmem %s209, %s223
      %v229 = vld [vmem:[%s228] sm:$0xff]
      %v230 = vld [vmem:[%s228 + $0x8] sm:$0xff]
      %v231 = vld [vmem:[%s1] sm:$0xff]
      %v232 = vld [vmem:[%s1 + $0x8] sm:$0xff]
      %v233 = vld [vmem:[%s1 + $0x10] sm:$0xff]
      %v234 = vld [vmem:[%s1 + $0x18] sm:$0xff]
      %v235 = vld [vmem:[%s1 + $0x20] sm:$0xff]
      %v236 = vld [vmem:[%s1 + $0x28] sm:$0xff]
      %v237 = vld [vmem:[%s1 + $0x30] sm:$0xff]
      %v238 = vld [vmem:[%s1 + $0x38] sm:$0xff]
      %v239 = vld [vmem:[%s1 + $0x40] sm:$0xff]
      %vm240 = vcmask 588800
      %v242 = vsel %vm240, %v229, 0
      %v245 = vsel %vm240, %v230, 0
      %247 = vmatpush.msra.mxu0 0.0
      %248 = vmatpush.msra.mxu0 0.0
      %249 = vmatpush.msra.mxu0 0.0
      %250 = vmatpush.msra.mxu0 0.0
      %251 = vmatpush.msra.mxu0 0.0
      %252 = vmatpush.msra.mxu0 0.0
      %253 = vmatpush.msra.mxu0 0.0
      %254 = vmatpush.msra.mxu0 %v239
      %255 = vmatpush.msra.mxu0 %v238
      %256 = vmatpush.msra.mxu0 %v237
      %257 = vmatpush.msra.mxu0 %v236
      %258 = vmatpush.msra.mxu0 %v235
      %259 = vmatpush.msra.mxu0 %v234
      %260 = vmatpush.msra.mxu0 %v233
      %261 = vmatpush.msra.mxu0 %v232
      %262 = vmatpush.msra.mxu0 %v231
      %263 = vmatmul.f32.gmra.mxu0 %v242
      %v264 = vpop.f32.mrf.mxu0
      %v265 = vadd.f32 0.0, %v264
      %266 = vmatmul.f32.gmra.mxu0 %v245
      %v267 = vpop.f32.mrf.mxu0
      %v268 = vadd.f32 0.0, %v267
      %269 = vdwg.mxu0
      %v270 = vadd.f32 %v226, %v265
      %v271 = vadd.f32 %v226, %v268
      %s272 = sadd.s32 %s223, 1
      %s273 = scalar_lea.vmem %s209, %s272
      %v274 = vld [vmem:[%s273] sm:$0xff]
      %v275 = vld [vmem:[%s273 + $0x8] sm:$0xff]
      %s276 = scalar_lea.vmem %s1, 72
      %v277 = vld [vmem:[%s276] sm:$0xff]
      %v278 = vld [vmem:[%s276 + $0x8] sm:$0xff]
      %v279 = vld [vmem:[%s276 + $0x10] sm:$0xff]
      %v280 = vld [vmem:[%s276 + $0x18] sm:$0xff]
      %v281 = vld [vmem:[%s276 + $0x20] sm:$0xff]
      %v282 = vld [vmem:[%s276 + $0x28] sm:$0xff]
      %v283 = vld [vmem:[%s276 + $0x30] sm:$0xff]
      %v284 = vld [vmem:[%s276 + $0x38] sm:$0xff]
      %v285 = vld [vmem:[%s276 + $0x40] sm:$0xff]
      %v287 = vsel %vm240, %v274, 0
      %v290 = vsel %vm240, %v275, 0
      %292 = vmatpush.msra.mxu0 0.0
      %293 = vmatpush.msra.mxu0 0.0
      %294 = vmatpush.msra.mxu0 0.0
      %295 = vmatpush.msra.mxu0 0.0
      %296 = vmatpush.msra.mxu0 0.0
      %297 = vmatpush.msra.mxu0 0.0
      %298 = vmatpush.msra.mxu0 0.0
      %299 = vmatpush.msra.mxu0 %v285
      %300 = vmatpush.msra.mxu0 %v284
      %301 = vmatpush.msra.mxu0 %v283
      %302 = vmatpush.msra.mxu0 %v282
      %303 = vmatpush.msra.mxu0 %v281
      %304 = vmatpush.msra.mxu0 %v280
      %305 = vmatpush.msra.mxu0 %v279
      %306 = vmatpush.msra.mxu0 %v278
      %307 = vmatpush.msra.mxu0 %v277
      %308 = vmatmul.f32.gmra.mxu0 %v287
      %v309 = vpop.f32.mrf.mxu0
      %v310 = vadd.f32 0.0, %v309
      %311 = vmatmul.f32.gmra.mxu0 %v290
      %v312 = vpop.f32.mrf.mxu0
      %v313 = vadd.f32 0.0, %v312
      %314 = vdwg.mxu0
      %v315 = vadd.f32 %v270, %v310
      %v316 = vadd.f32 %v271, %v313
      %s317 = sadd.s32 %s223, 2
      %s318 = scalar_lea.vmem %s209, %s317
      %v319 = vld [vmem:[%s318] sm:$0xff]
      %v320 = vld [vmem:[%s318 + $0x8] sm:$0xff]
      %s321 = scalar_lea.vmem %s1, 144
      %v322 = vld [vmem:[%s321] sm:$0xff]
      %v323 = vld [vmem:[%s321 + $0x8] sm:$0xff]
      %v324 = vld [vmem:[%s321 + $0x10] sm:$0xff]
      %v325 = vld [vmem:[%s321 + $0x18] sm:$0xff]
      %v326 = vld [vmem:[%s321 + $0x20] sm:$0xff]
      %v327 = vld [vmem:[%s321 + $0x28] sm:$0xff]
      %v328 = vld [vmem:[%s321 + $0x30] sm:$0xff]
      %v329 = vld [vmem:[%s321 + $0x38] sm:$0xff]
      %v330 = vld [vmem:[%s321 + $0x40] sm:$0xff]
      %v332 = vsel %vm240, %v319, 0
      %v335 = vsel %vm240, %v320, 0
      %337 = vmatpush.msra.mxu0 0.0
      %338 = vmatpush.msra.mxu0 0.0
      %339 = vmatpush.msra.mxu0 0.0
      %340 = vmatpush.msra.mxu0 0.0
      %341 = vmatpush.msra.mxu0 0.0
      %342 = vmatpush.msra.mxu0 0.0
      %343 = vmatpush.msra.mxu0 0.0
      %344 = vmatpush.msra.mxu0 %v330
      %345 = vmatpush.msra.mxu0 %v329
      %346 = vmatpush.msra.mxu0 %v328
      %347 = vmatpush.msra.mxu0 %v327
      %348 = vmatpush.msra.mxu0 %v326
      %349 = vmatpush.msra.mxu0 %v325
      %350 = vmatpush.msra.mxu0 %v324
      %351 = vmatpush.msra.mxu0 %v323
      %352 = vmatpush.msra.mxu0 %v322
      %353 = vmatmul.f32.gmra.mxu0 %v332
      %v354 = vpop.f32.mrf.mxu0
      %v355 = vadd.f32 0.0, %v354
      %356 = vmatmul.f32.gmra.mxu0 %v335
      %v357 = vpop.f32.mrf.mxu0
      %v358 = vadd.f32 0.0, %v357
      %359 = vdwg.mxu0
      %v360 = vadd.f32 %v315, %v355
      %v361 = vadd.f32 %v316, %v358
      %vm362 = vcmask 523264
      %363 = vst.msk [vmem:[%s221] sm:$0xff] %vm362, %v360
      %364 = vst.msk [vmem:[%s221 + $0x8] sm:$0xff] %vm362, %v361
      %s365 = smul.u32 2, %s21
      %p366 = scmp.lt.s32.totalorder %s19, 1
      %s367 = scalar_select %p366, %s19, 1
      %p368 = scmp.lt.s32.totalorder %s365, 1
      %s369 = scalar_select %p368, %s365, 1
      %p370 = scmp.lt.s32.totalorder %s20, 0
      %s371 = scalar_select %p370, %s20, 0
      %s372 = sadd.s32 %s371, %s369
      %s373 = smul.addr %s367, 2
      %s374 = sadd.s32 %s372, %s373
      %s375 = smul.addr %s374, 8
      %s376 = scalar_lea.vmem %s3, %s375
      // Predicated region
      $region33: #{_forward.1} parent=31 // pred_check
        %p377 = pneg %p125
      $region34: #{_forward.1} parent=31 // pred_check_branch
        %379 = sbr.rel (%p377) target = $region36
      $region35: #{_forward.1} parent=31 // pred_region
        %s380 = smul.u32 2, %s21
      $region36: #{_forward.1} parent=31 // pred_fallthru
        _
    $region32: #{_forward.1} parent=5 // pred_fallthru
      _
    %p381 = scmp.le.s32.totalorder 2, %s9
    // Predicated region
    $region37: #{_forward.1} parent=5 // pred_check
      %p382 = pneg %p381
    $region38: #{_forward.1} parent=5 // pred_check_branch
      %384 = sbr.rel (%p382) target = $region40
    $region39: #{_forward.1} parent=5 // pred_region
      %s385 = ssub.s32 %s9, 2
      // Predicated region
      $region41: #{_forward.1} parent=39 // pred_check
        %p386 = pneg %p131
      $region42: #{_forward.1} parent=39 // pred_check_branch
        %388 = sbr.rel (%p386) target = $region44
      $region43: #{_forward.1} parent=39 // pred_region
        %s389 = smul.u32 2, %s24
        %p390 = scmp.lt.s32.totalorder %s22, 1
        %s391 = scalar_select %p390, %s22, 1
        %p392 = scmp.lt.s32.totalorder %s389, 1
        %s393 = scalar_select %p392, %s389, 1
        %p394 = scmp.lt.s32.totalorder %s23, 0
        %s395 = scalar_select %p394, %s23, 0
        %s396 = sadd.s32 %s395, %s393
        %s397 = smul.addr %s391, 2
        %s398 = sadd.s32 %s396, %s397
        %s399 = smul.addr %s398, 8
        %s400 = scalar_lea.vmem %s3, %s399
      $region44: #{_forward.1} parent=39 // pred_fallthru
        _
    $region40: #{_forward.1} parent=5 // pred_fallthru
      _
  $region6: #{_forward.1} parent=0 // loop_footer
    %s13 = sadd.s32 1, %s9
  $region7: #{_forward.1} parent=0 // loop_footer_branch
    %8 = sbr.rel target = $region3
  $region8: #{_forward.1} parent=0 // loop_exit
    _

</llo_original>
